<compile_context>
chip_gen: v7x
topology: tpu7x:2x2x1
jax: 0.10.0
libtpu: 0.0.40
codegen_flags: <defaults>
</compile_context>

<pallas_src>
import jax
import jax.numpy as jnp
import numpy as np
from jax import lax
from jax.experimental import pallas as pl
from jax.experimental.pallas import tpu as pltpu

_EPS = 1e-12  # F.normalize default eps


def _round_up(a, b):
    return (a + b - 1) // b * b


def _angle_linear_kernel(x_ref, w_ref, invw_ref, o_ref, xsq_ref, acc_ref=None):
    """One (i, j, k) grid step of cos = clip(norm(x) @ norm(w), -1, 1).

    x_ref    : (tm, tk)  matmul-dtype input tile
    w_ref    : (tk, tn)  matmul-dtype weight tile
    invw_ref : (1, tn)   f32 precomputed 1/||w_col||
    o_ref    : (tm, tn)  output tile; doubles as the f32 accumulator when the
               output dtype is f32 (its block index is constant in k)
    xsq_ref  : (tm, 1)   f32 running sum of x^2 per row
    acc_ref  : optional (tm, tn) f32 scratch, only when output dtype != f32
    """
    k = pl.program_id(2)
    acc = o_ref if acc_ref is None else acc_ref

    @pl.when(k == 0)
    def _init():
        acc[...] = jnp.zeros_like(acc)
        xsq_ref[...] = jnp.zeros_like(xsq_ref)

    x = x_ref[...]                                   # (tm, tk), matmul dtype
    xf = x.astype(jnp.float32)
    xsq_ref[...] += jnp.sum(xf * xf, axis=1, keepdims=True)   # fused row norms

    # Raw (un-normalized) matmul accumulated in f32 on the MXU.
    acc[...] += jnp.dot(x, w_ref[...], preferred_element_type=jnp.float32)

    @pl.when(k == pl.num_programs(2) - 1)
    def _finalize():
        # 1 / max(||x_row||, eps) == rsqrt(max(sum x^2, eps^2)); rsqrt on EUP.
        inv_x = lax.rsqrt(jnp.maximum(xsq_ref[...], _EPS * _EPS))   # (tm, 1)
        cos = acc[...] * inv_x * invw_ref[...]
        o_ref[...] = jnp.clip(cos, -1.0, 1.0).astype(o_ref.dtype)


def angle_simple_linear(x, weight, *, matmul_dtype=jnp.bfloat16,
                        out_dtype=jnp.float32, tm=512, tk=1024, tn=1024):
    """Cosine-similarity linear layer.

    x: (B, in_features), weight: (in_features, out_features).
    Returns clip(normalize(x, axis=1) @ normalize(weight, axis=0), -1, 1).

    matmul_dtype selects the MXU operand dtype (bf16 default: native on
    v5e/v6e/v7x; accumulation and norms stay f32 either way).
    """
    B, K = x.shape
    K_w, N = weight.shape
    assert K_w == K, (x.shape, weight.shape)
    matmul_dtype = np.dtype(matmul_dtype)
    out_dtype = np.dtype(out_dtype)
    acc_in_out = out_dtype == np.dtype(jnp.float32)

    # ---- tile selection --------------------------------------------------
    tm = min(tm, _round_up(B, 8))          # small B -> single M tile: weight
    if tm >= 256:                          # matrix streamed from HBM once.
        tm = _round_up(tm, 256)            # v6e/v7x MXU is 2x256x256.
    tk = min(tk, _round_up(K, 128))        # lane-dense K tiles
    tn = min(tn, _round_up(N, 128))        # lane-dense N tiles

    pad_b = _round_up(B, tm)
    grid_m = pad_b // tm
    # v7x megacore balance: if M collapsed to one tile, make sure the parallel
    # N axis has >= 2 tiles so both TensorCores get work.
    if grid_m == 1 and _round_up(N, tn) // tn < 2 and N > 128:
        tn = max(128, _round_up(-(-N // 2), 128))

    pad_k = _round_up(K, tk)
    pad_n = _round_up(N, tn)
    grid = (grid_m, pad_n // tn, pad_k // tk)

    # ---- host-side prep (zero padding is exact for both matmul and norms) -
    w32 = weight.astype(jnp.float32)
    if (pad_k, pad_n) != (K, N):
        w32 = jnp.pad(w32, ((0, pad_k - K), (0, pad_n - N)))
    # Precompute 1/||w_col|| once (padded zero columns give 0 output, sliced off).
    inv_w = lax.rsqrt(jnp.maximum(jnp.sum(w32 * w32, axis=0, keepdims=True),
                                  _EPS * _EPS))                   # (1, pad_n) f32
    w_mm = w32.astype(matmul_dtype)

    x_p = x
    if (pad_b, pad_k) != (B, K):
        x_p = jnp.pad(x_p, ((0, pad_b - B), (0, pad_k - K)))
    x_mm = x_p.astype(matmul_dtype)

    # ---- VMEM budget (double-buffered tiles + scratch) ---------------------
    need = (2 * tm * tk * matmul_dtype.itemsize        # x tiles
            + 2 * tk * tn * matmul_dtype.itemsize      # w tiles
            + 2 * tm * tn * out_dtype.itemsize         # out tiles
            + 2 * tn * 4 + tm * 4)                     # inv_w tiles + xsq scratch
    if not acc_in_out:
        need += tm * tn * 4                            # separate f32 accumulator
    vmem_limit = int(min(max(2 * need, 16 << 20), 56 << 20))  # fits v7x 64 MiB

    scratch_shapes = [pltpu.VMEM((tm, 1), jnp.float32)]        # sum of x^2 per row
    if not acc_in_out:
        scratch_shapes.append(pltpu.VMEM((tm, tn), jnp.float32))

    # TODO(synk): for an HBM-bound GEMV regime (grid_m == 1) a deeper weight
    # pipeline (pl.BlockSpec(..., pipeline_mode=pl.Buffered(3))) can hide more
    # DMA latency; left at the default depth here.
    out = pl.pallas_call(
        _angle_linear_kernel,
        out_shape=jax.ShapeDtypeStruct((pad_b, pad_n), out_dtype),
        grid=grid,
        in_specs=[
            pl.BlockSpec((tm, tk), lambda i, j, k: (i, k)),
            pl.BlockSpec((tk, tn), lambda i, j, k: (k, j)),
            pl.BlockSpec((1, tn), lambda i, j, k: (0, j)),
        ],
        out_specs=pl.BlockSpec((tm, tn), lambda i, j, k: (i, j)),
        scratch_shapes=scratch_shapes,
        compiler_params=pltpu.CompilerParams(
            dimension_semantics=("parallel", "parallel", "arbitrary"),
            vmem_limit_bytes=vmem_limit),
    )(x_mm, w_mm, inv_w)

    if (pad_b, pad_n) != (B, N):
        out = out[:B, :N]
    return out


def init_angle_weight(key, in_features, out_features):
    """Mimics: torch.Tensor(in,out).uniform_(-1,1).renorm_(2, 1, 1e-5).mul_(1e5)."""
    w = jax.random.uniform(key, (in_features, out_features),
                           dtype=jnp.float32, minval=-1.0, maxval=1.0)
    maxnorm = 1e-05
    col_norm = jnp.sqrt(jnp.sum(w * w, axis=0, keepdims=True))
    scale = jnp.where(col_norm > maxnorm, maxnorm / (col_norm + 1e-7), 1.0)
    return w * scale * 100000.0


def reference(x, weight):
    xn = x / jnp.maximum(jnp.linalg.norm(x, axis=1, keepdims=True), _EPS)
    wn = weight / jnp.maximum(jnp.linalg.norm(weight, axis=0, keepdims=True), _EPS)
    return jnp.clip(xn @ wn, -1.0, 1.0)


if __name__ == "__main__":
    key = jax.random.PRNGKey(0)
    kx, kw = jax.random.split(key)

    B, in_features, out_features = 16, 256, 256
    x = jax.random.normal(kx, (B, in_features), dtype=jnp.float32)
    weight = init_angle_weight(kw, in_features, out_features)

    ref = reference(x, weight)

    # f32-operand path with tiny tiles so even this toy shape exercises the
    # full (2, 2, 2) grid and the K-reduction accumulator held in o_ref.
    out_f32 = jax.block_until_ready(
        angle_simple_linear(x, weight, matmul_dtype=jnp.float32,
                            tm=8, tk=128, tn=128))
    assert out_f32.shape == (B, out_features)
    err = jnp.max(jnp.abs(out_f32 - ref))
    assert jnp.allclose(out_f32, ref, atol=1e-4, rtol=1e-4), f"f32 max abs err = {err}"

    # Default path: bf16 MXU operands pre-cast in the wrapper, f32 accumulation.
    out_bf = jax.block_until_ready(angle_simple_linear(x, weight))
    err_bf = jnp.max(jnp.abs(out_bf - ref))
    assert jnp.allclose(out_bf, ref, atol=5e-2, rtol=5e-2), f"bf16 max abs err = {err_bf}"

    # bf16 output dtype path (exercises the separate f32 accumulator scratch).
    out_bf16o = jax.block_until_ready(
        angle_simple_linear(x, weight, out_dtype=jnp.bfloat16)).astype(jnp.float32)
    err_o = jnp.max(jnp.abs(out_bf16o - ref))
    assert jnp.allclose(out_bf16o, ref, atol=5e-2, rtol=5e-2), f"bf16-out max abs err = {err_o}"

    print("KERNEL_OK")
</pallas_src>

<mosaic_0001>
module attributes {stable_mosaic.version = 11 : i64} {
  func.func @_angle_linear_kernel(%arg0: i32, %arg1: i32, %arg2: i32, %arg3: memref<8x128xf32, #tpu.memory_space<vmem>>, %arg4: memref<128x128xf32, #tpu.memory_space<vmem>>, %arg5: memref<1x128xf32, #tpu.memory_space<vmem>>, %arg6: memref<8x128xf32, #tpu.memory_space<vmem>>, %arg7: memref<8x1xf32, #tpu.memory_space<vmem>>) attributes {dimension_semantics = [#tpu.dimension_semantics<parallel>, #tpu.dimension_semantics<parallel>, #tpu.dimension_semantics<arbitrary>], iteration_bounds = array<i64: 2, 2, 2>, scalar_prefetch = 0 : i64, scratch_operands = 1 : i64, tpu.core_type = #tpu.core_type<tc>, window_params = [{transform_indices = @transform_0, window_bounds = array<i64: 8, 128>}, {transform_indices = @transform_1, window_bounds = array<i64: 128, 128>}, {transform_indices = @transform_2, window_bounds = array<i64: 1, 128>}, {transform_indices = @transform_3, window_bounds = array<i64: 8, 128>}]} {
    %c0_i32 = arith.constant 0 : i32
    %0 = arith.cmpi eq, %arg2, %c0_i32 : i32
    %1 = arith.extui %0 : i1 to i32
    %c0_i32_0 = arith.constant 0 : i32
    %2 = arith.cmpi ne, %1, %c0_i32_0 : i32
    scf.if %2 {
      %cst_14 = arith.constant 0.000000e+00 : f32
      %18 = vector.broadcast %cst_14 : f32 to vector<8x128xf32>
      %c0_15 = arith.constant 0 : index
      %c0_16 = arith.constant 0 : index
      %19 = vector.load %arg6[%c0_15, %c0_16] : memref<8x128xf32, #tpu.memory_space<vmem>>, vector<8x128xf32>
      tpu.vector_store %arg6[%c0_15, %c0_16], %18 {strides = array<i32>} : memref<8x128xf32, #tpu.memory_space<vmem>>, vector<8x128xf32>,
      %cst_17 = arith.constant 0.000000e+00 : f32
      %20 = vector.broadcast %cst_17 : f32 to vector<8x1xf32>
      %c0_18 = arith.constant 0 : index
      %c0_19 = arith.constant 0 : index
      %21 = vector.load %arg7[%c0_18, %c0_19] : memref<8x1xf32, #tpu.memory_space<vmem>>, vector<8x1xf32>
      tpu.vector_store %arg7[%c0_18, %c0_19], %20 {strides = array<i32>} : memref<8x1xf32, #tpu.memory_space<vmem>>, vector<8x1xf32>,
    } else {
    }
    %c0 = arith.constant 0 : index
    %c0_1 = arith.constant 0 : index
    %3 = vector.load %arg3[%c0, %c0_1] : memref<8x128xf32, #tpu.memory_space<vmem>>, vector<8x128xf32>
    %c0_2 = arith.constant 0 : index
    %c0_3 = arith.constant 0 : index
    %4 = vector.load %arg7[%c0_2, %c0_3] : memref<8x1xf32, #tpu.memory_space<vmem>>, vector<8x1xf32>
    %5 = arith.mulf %3, %3 : vector<8x128xf32>
    %cst = arith.constant dense<0.000000e+00> : vector<8xf32>
    %6 = vector.multi_reduction <add>, %5, %cst [1] : vector<8x128xf32> to vector<8xf32>
    %7 = vector.shape_cast %6 : vector<8xf32> to vector<8x1xf32>
    %8 = arith.addf %4, %7 : vector<8x1xf32>
    %c0_4 = arith.constant 0 : index
    %c0_5 = arith.constant 0 : index
    %9 = vector.load %arg7[%c0_4, %c0_5] : memref<8x1xf32, #tpu.memory_space<vmem>>, vector<8x1xf32>
    tpu.vector_store %arg7[%c0_4, %c0_5], %8 {strides = array<i32>} : memref<8x1xf32, #tpu.memory_space<vmem>>, vector<8x1xf32>,
    %c0_6 = arith.constant 0 : index
    %c0_7 = arith.constant 0 : index
    %10 = vector.load %arg6[%c0_6, %c0_7] : memref<8x128xf32, #tpu.memory_space<vmem>>, vector<8x128xf32>
    %c0_8 = arith.constant 0 : index
    %c0_9 = arith.constant 0 : index
    %11 = vector.load %arg4[%c0_8, %c0_9] : memref<128x128xf32, #tpu.memory_space<vmem>>, vector<128x128xf32>
    %cst_10 = arith.constant dense<0.000000e+00> : vector<8x128xf32>
    %12 = tpu.matmul %3, %11, %cst_10 {dimension_numbers = #tpu.dot_dimension_numbers<[1], [0], [0], [1], [0, 0, 1, 1], [], []>} : vector<8x128xf32>, vector<128x128xf32>, vector<8x128xf32> -> vector<8x128xf32>
    %13 = arith.addf %10, %12 : vector<8x128xf32>
    %c0_11 = arith.constant 0 : index
    %c0_12 = arith.constant 0 : index
    %14 = vector.load %arg6[%c0_11, %c0_12] : memref<8x128xf32, #tpu.memory_space<vmem>>, vector<8x128xf32>
    tpu.vector_store %arg6[%c0_11, %c0_12], %13 {strides = array<i32>} : memref<8x128xf32, #tpu.memory_space<vmem>>, vector<8x128xf32>,
    %c1_i32 = arith.constant 1 : i32
    %15 = arith.cmpi eq, %arg2, %c1_i32 : i32
    %16 = arith.extui %15 : i1 to i32
    %c0_i32_13 = arith.constant 0 : i32
    %17 = arith.cmpi ne, %16, %c0_i32_13 : i32
    scf.if %17 {
      %c0_14 = arith.constant 0 : index
      %c0_15 = arith.constant 0 : index
      %18 = vector.load %arg7[%c0_14, %c0_15] : memref<8x1xf32, #tpu.memory_space<vmem>>, vector<8x1xf32>
      %cst_16 = arith.constant 1.000000e-24 : f32
      %19 = vector.broadcast %cst_16 : f32 to vector<8x1xf32>
      %20 = arith.maximumf %18, %19 : vector<8x1xf32>
      %21 = math.rsqrt %20 : vector<8x1xf32>
      %c0_17 = arith.constant 0 : index
      %c0_18 = arith.constant 0 : index
      %22 = vector.load %arg6[%c0_17, %c0_18] : memref<8x128xf32, #tpu.memory_space<vmem>>, vector<8x128xf32>
      %23 = vector.broadcast %21 : vector<8x1xf32> to vector<8x128xf32>
      %24 = arith.mulf %22, %23 : vector<8x128xf32>
      %c0_19 = arith.constant 0 : index
      %c0_20 = arith.constant 0 : index
      %25 = vector.load %arg5[%c0_19, %c0_20] : memref<1x128xf32, #tpu.memory_space<vmem>>, vector<1x128xf32>
      %26 = vector.broadcast %25 : vector<1x128xf32> to vector<8x128xf32>
      %27 = arith.mulf %24, %26 : vector<8x128xf32>
      %cst_21 = arith.constant -1.000000e+00 : f32
      %cst_22 = arith.constant 1.000000e+00 : f32
      %28 = vector.broadcast %cst_21 : f32 to vector<8x128xf32>
      %29 = arith.maximumf %28, %27 : vector<8x128xf32>
      %30 = vector.broadcast %cst_22 : f32 to vector<8x128xf32>
      %31 = arith.minimumf %30, %29 : vector<8x128xf32>
      %c0_23 = arith.constant 0 : index
      %c0_24 = arith.constant 0 : index
      %32 = vector.load %arg6[%c0_23, %c0_24] : memref<8x128xf32, #tpu.memory_space<vmem>>, vector<8x128xf32>
      tpu.vector_store %arg6[%c0_23, %c0_24], %31 {strides = array<i32>} : memref<8x128xf32, #tpu.memory_space<vmem>>, vector<8x128xf32>,
    } else {
    }
    return
  }
  func.func @transform_0(%arg0: i32, %arg1: i32, %arg2: i32) -> (i32, i32) {
    %c0_i32 = arith.constant 0 : i32
    return %arg0, %arg2 : i32, i32
  }
  func.func @transform_1(%arg0: i32, %arg1: i32, %arg2: i32) -> (i32, i32) {
    %c0_i32 = arith.constant 0 : i32
    return %arg2, %arg1 : i32, i32
  }
  func.func @transform_2(%arg0: i32, %arg1: i32, %arg2: i32) -> (i32, i32) {
    %c0_i32 = arith.constant 0 : i32
    %c0_i32_0 = arith.constant 0 : i32
    return %c0_i32, %arg1 : i32, i32
  }
  func.func @transform_3(%arg0: i32, %arg1: i32, %arg2: i32) -> (i32, i32) {
    %c0_i32 = arith.constant 0 : i32
    return %arg0, %arg1 : i32, i32
  }
}

</mosaic_0001>

<llo_original>
// kernel: tpu_custom_call.1
$region0: #{tpu_custom_call.1}
  #allocation0 [shape = 'u32[]', space=smem, size = 0x4, offset = 0x4, fixed_abs, tag = 'smem constant byte address 0x4 - core index']
  #allocation1 [shape = 'u32[144,128]{1,0:T(1,128)}', space=vmem, size = 0x12000, scoped, tag = 'internal scratch']
  #allocation2 [shape = 'f32[8,1]{1,0:T(8,128)}', space=vmem, size = 0x1000, scoped, tag = 'scratch operand']
  %s0 = inlined_call_operand.hbm [shape: f32[16,256], index: 0, kind: input, shape index: {}]
  %s1 = inlined_call_operand.hbm [shape: f32[256,256], index: 1, kind: input, shape index: {}]
  %s2 = inlined_call_operand.vmem [shape: f32[1,256], index: 2, kind: input, shape index: {}]
  %s3 = inlined_call_operand.hbm [shape: f32[16,256], index: 3, kind: output, shape index: {}]
  %s4 = sld [smem:[#allocation0]]
  $region61: #{tpu_custom_call.1} parent=0
    _
  %s6 = ssub.s32 1, %s4
  %s7 = scalar_select 0, %s6, %s4
  $region1: #{tpu_custom_call.1} parent=0
    #allocation3 [shape = 'u8[8192]{0}', space=vmem, size = 0x2000, scoped, tag = 'input window, operand 0']
    #allocation4 [shape = 's32[2]{0}', space=sflag, size = 0x8, scoped, tag = 'scoped memory for tpu_custom_call.1']
    #allocation5 [shape = 's32[2]{0}', space=sflag, size = 0x8, scoped, tag = 'scoped memory for tpu_custom_call.1']
    #allocation6 [shape = 'u8[131072]{0}', space=vmem, size = 0x20000, scoped, tag = 'input window, operand 1']
    #allocation7 [shape = 's32[2]{0}', space=sflag, size = 0x8, scoped, tag = 'scoped memory for tpu_custom_call.1']
    #allocation8 [shape = 'u8[8192]{0}', space=vmem, size = 0x2000, scoped, tag = 'output window, operand 0']
    %8 = vsyncpa [#allocation4], 0
    %s9 = scalar_lea.sflag [#allocation4], 1
    %10 = vsyncpa %s9, 0
    %11 = vsyncpa [#allocation7], 0
    %s12 = scalar_lea.sflag [#allocation7], 1
    %13 = vsyncpa %s12, 0
    %14 = vsyncpa [#allocation5], 0
    %s15 = scalar_lea.sflag [#allocation5], 1
    %16 = vsyncpa %s15, 0
    loop: start=0, step=1, limit=10
    $region2: #{tpu_custom_call.1} parent=1 // loop_pre_header
      _
    $region3: #{tpu_custom_call.1} parent=1 // loop_header
      %s18 = sphi 0, %s22
      %p19 = scmp.ge.s32.totalorder %s18, 10
      %s25 = sphi 0, %s44
      %s26 = sphi 0, %s40
      %s27 = sphi 0, %s36
      %s28 = sphi 0, %s25
      %s29 = sphi 0, %s26
      %s30 = sphi 0, %s27
      %s31 = sphi 0, %s28
      %s32 = sphi 0, %s29
      %s33 = sphi 0, %s30
      %s49 = sphi 0, %s51
      %s52 = sphi 0, %s49
      %s53 = sphi 0, %s52
      %s69 = sphi 0, %s53
      %s77 = sphi 0, %s79
      %s80 = sphi 0, %s77
      %s81 = sphi 0, %s80
      %s97 = sphi 0, %s81
      %s103 = sphi 0, %s105
      %s106 = sphi 0, %s103
      %s107 = sphi 0, %s106
      %s123 = sphi 0, %s107
      %s131 = sphi 0, %s133
      %s134 = sphi 0, %s131
      %s135 = sphi 0, %s134
      %s151 = sphi 0, %s135
    $region4: #{tpu_custom_call.1} parent=1 // loop_header_branch
      %21 = sbr.rel (%p19) target = $region8
    $region5: #{tpu_custom_call.1} parent=1 // loop_body
      %s23 = ssub.s32 %s18, 1
      %s24 = ssub.s32 %s18, 2
      %s34 = sadd.s32 1, %s27
      %p35 = scmp.ge.s32.totalorder %s34, 2
      %s36 = scalar_select %p35, 0, %s34
      %s37 = sadd.s32 1, %s26
      %s38 = scalar_select %p35, %s37, %s26
      %p39 = scmp.ge.s32.totalorder %s38, 2
      %s40 = scalar_select %p39, 0, %s38
      %s41 = sadd.s32 1, %s25
      %s42 = scalar_select %p39, %s41, %s25
      %p43 = scmp.ge.s32.totalorder %s42, 2
      %s44 = scalar_select %p43, 0, %s42
      %s45 = ssub.s32 %s25, %s44
      %s46 = ssub.s32 %s27, %s36
      %s47 = sor.u32 %s45, %s46
      %p48 = scmp.eq.s32.totalorder %s47, 0
      %s50 = sadd.s32 %s49, 1
      %s51 = scalar_select %p48, %s49, %s50
      %p54 = pneg %p48
      %p55 = scmp.eq.s32.totalorder %s18, 7
      %p56 = por %p54, %p55
      %p57 = scmp.ne.s32.totalorder %s49, %s52
      %p58 = scmp.eq.s32.totalorder %s18, 0
      %p59 = por %p57, %p58
      %p60 = scmp.ne.s32.totalorder %s49, %s52
      %p61 = scmp.eq.s32.totalorder %s23, 7
      %p62 = por %p60, %p61
      %p63 = scmp.ne.s32.totalorder %s52, %s53
      %p64 = scmp.eq.s32.totalorder %s23, 0
      %p65 = por %p63, %p64
      %p66 = scmp.ne.s32.totalorder %s52, %s53
      %p67 = scmp.eq.s32.totalorder %s24, 7
      %p68 = por %p66, %p67
      %p70 = scmp.ne.s32.totalorder %s53, %s69
      %p71 = scmp.eq.s32.totalorder %s24, 0
      %p72 = por %p70, %p71
      %s73 = ssub.s32 %s27, %s36
      %s74 = ssub.s32 %s26, %s40
      %s75 = sor.u32 %s73, %s74
      %p76 = scmp.eq.s32.totalorder %s75, 0
      %s78 = sadd.s32 %s77, 1
      %s79 = scalar_select %p76, %s77, %s78
      %p82 = pneg %p76
      %p83 = scmp.eq.s32.totalorder %s18, 7
      %p84 = por %p82, %p83
      %p85 = scmp.ne.s32.totalorder %s77, %s80
      %p86 = scmp.eq.s32.totalorder %s18, 0
      %p87 = por %p85, %p86
      %p88 = scmp.ne.s32.totalorder %s77, %s80
      %p89 = scmp.eq.s32.totalorder %s23, 7
      %p90 = por %p88, %p89
      %p91 = scmp.ne.s32.totalorder %s80, %s81
      %p92 = scmp.eq.s32.totalorder %s23, 0
      %p93 = por %p91, %p92
      %p94 = scmp.ne.s32.totalorder %s80, %s81
      %p95 = scmp.eq.s32.totalorder %s24, 7
      %p96 = por %p94, %p95
      %p98 = scmp.ne.s32.totalorder %s81, %s97
      %p99 = scmp.eq.s32.totalorder %s24, 0
      %p100 = por %p98, %p99
      %s101 = ssub.s32 %s26, %s40
      %p102 = scmp.eq.s32.totalorder %s101, 0
      %s104 = sadd.s32 %s103, 1
      %s105 = scalar_select %p102, %s103, %s104
      %p108 = pneg %p102
      %p109 = scmp.eq.s32.totalorder %s18, 7
      %p110 = por %p108, %p109
      %p111 = scmp.ne.s32.totalorder %s103, %s106
      %p112 = scmp.eq.s32.totalorder %s18, 0
      %p113 = por %p111, %p112
      %p114 = scmp.ne.s32.totalorder %s103, %s106
      %p115 = scmp.eq.s32.totalorder %s23, 7
      %p116 = por %p114, %p115
      %p117 = scmp.ne.s32.totalorder %s106, %s107
      %p118 = scmp.eq.s32.totalorder %s23, 0
      %p119 = por %p117, %p118
      %p120 = scmp.ne.s32.totalorder %s106, %s107
      %p121 = scmp.eq.s32.totalorder %s24, 7
      %p122 = por %p120, %p121
      %p124 = scmp.ne.s32.totalorder %s107, %s123
      %p125 = scmp.eq.s32.totalorder %s24, 0
      %p126 = por %p124, %p125
      %s127 = ssub.s32 %s25, %s44
      %s128 = ssub.s32 %s26, %s40
      %s129 = sor.u32 %s127, %s128
      %p130 = scmp.eq.s32.totalorder %s129, 0
      %s132 = sadd.s32 %s131, 1
      %s133 = scalar_select %p130, %s131, %s132
      %p136 = pneg %p130
      %p137 = scmp.eq.s32.totalorder %s18, 7
      %p138 = por %p136, %p137
      %p139 = scmp.ne.s32.totalorder %s131, %s134
      %p140 = scmp.eq.s32.totalorder %s18, 0
      %p141 = por %p139, %p140
      %p142 = scmp.ne.s32.totalorder %s131, %s134
      %p143 = scmp.eq.s32.totalorder %s23, 7
      %p144 = por %p142, %p143
      %p145 = scmp.ne.s32.totalorder %s134, %s135
      %p146 = scmp.eq.s32.totalorder %s23, 0
      %p147 = por %p145, %p146
      %p148 = scmp.ne.s32.totalorder %s134, %s135
      %p149 = scmp.eq.s32.totalorder %s24, 7
      %p150 = por %p148, %p149
      %p152 = scmp.ne.s32.totalorder %s135, %s151
      %p153 = scmp.eq.s32.totalorder %s24, 0
      %p154 = por %p152, %p153
      %p155 = scmp.le.s32.totalorder 1, %s18
      %p156 = scmp.lt.s32.totalorder %s18, 9
      %p157 = pnand %p155, %p156
      %p158 = pneg %p157
      // Predicated region
      $region9: #{tpu_custom_call.1} parent=5 // pred_check
        _
      $region10: #{tpu_custom_call.1} parent=5 // pred_check_branch
        %160 = sbr.rel (%p157) target = $region12
      $region11: #{tpu_custom_call.1} parent=5 // pred_region
        %s161 = ssub.s32 %s18, 1
      $region12: #{tpu_custom_call.1} parent=5 // pred_fallthru
        _
      %p162 = scmp.lt.s32.totalorder %s18, 8
      // Predicated region
      $region13: #{tpu_custom_call.1} parent=5 // pred_check
        %p163 = pneg %p162
      $region14: #{tpu_custom_call.1} parent=5 // pred_check_branch
        %165 = sbr.rel (%p163) target = $region16
      $region15: #{tpu_custom_call.1} parent=5 // pred_region
        // Predicated region
        $region17: #{tpu_custom_call.1} parent=15 // pred_check
          %p166 = pneg %p59
        $region18: #{tpu_custom_call.1} parent=15 // pred_check_branch
          %168 = sbr.rel (%p166) target = $region20
        $region19: #{tpu_custom_call.1} parent=15 // pred_region
          %s169 = sand.u32 %s49, 1
          %s170 = scalar_lea.sflag [#allocation4], %s169
          %s171 = sand.u32 %s49, 1
          %s172 = smul.addr %s171, 8
          %s173 = scalar_lea.vmem [#allocation3], %s172
          %s175 = ssub.s32 128, 128
          %176 = vsyncadd %s170, %s175
          %s177 = smul.addr %s25, 2
          %s178 = sadd.s32 %s27, %s177
          %s179 = smul.addr %s178, 128
          %s180 = scalar_lea.hbm %s0, %s179
          %s182 = sshll.u32 %s173, 4
          %s183 = int_to_ptr.vmem [resolvable:$true] %s182
          %185 = dma.hbm_to_vmem [thread:$0]  %s180, 128, %s183, %s170
        $region20: #{tpu_custom_call.1} parent=15 // pred_fallthru
          _
        // Predicated region
        $region21: #{tpu_custom_call.1} parent=15 // pred_check
          %p186 = pneg %p87
        $region22: #{tpu_custom_call.1} parent=15 // pred_check_branch
          %188 = sbr.rel (%p186) target = $region24
        $region23: #{tpu_custom_call.1} parent=15 // pred_region
          %s189 = sand.u32 %s77, 1
          %s190 = scalar_lea.sflag [#allocation7], %s189
          %s191 = sand.u32 %s77, 1
          %s192 = smul.addr %s191, 128
          %s193 = scalar_lea.vmem [#allocation6], %s192
          %s194 = smul.u32 16, %s27
          %s196 = ssub.s32 2048, 2048
          %197 = vsyncadd %s190, %s196
          %s198 = smul.addr %s194, 2
          %s199 = sadd.s32 %s26, %s198
          %s200 = smul.addr %s199, 128
          %s201 = scalar_lea.hbm %s1, %s200
          %s202 = sshll.u32 %s193, 4
          %s203 = int_to_ptr.vmem [resolvable:$true] %s202
          %208 = dma.hbm_to_vmem [thread:$0]  %s201, 2048, %s203, %s190, 256, 128, 8
        $region24: #{tpu_custom_call.1} parent=15 // pred_fallthru
          _
        // Predicated region
        $region25: #{tpu_custom_call.1} parent=15 // pred_check
          %p209 = pneg %p113
        $region26: #{tpu_custom_call.1} parent=15 // pred_check_branch
          %211 = sbr.rel (%p209) target = $region28
        $region27: #{tpu_custom_call.1} parent=15 // pred_region
          %p212 = scmp.lt.s32.totalorder %s26, 1
          %s213 = scalar_select %p212, %s26, 1
          %s214 = scalar_lea.vmem %s2, %s213
        $region28: #{tpu_custom_call.1} parent=15 // pred_fallthru
          _
      $region16: #{tpu_custom_call.1} parent=5 // pred_fallthru
        _
      %p215 = scmp.le.s32.totalorder 1, %s18
      %p216 = scmp.lt.s32.totalorder %s18, 9
      %p217 = pnand %p215, %p216
      %p218 = pneg %p217
      // Predicated region
      $region29: #{tpu_custom_call.1} parent=5 // pred_check
        _
      $region30: #{tpu_custom_call.1} parent=5 // pred_check_branch
        %220 = sbr.rel (%p217) target = $region32
      $region31: #{tpu_custom_call.1} parent=5 // pred_region
        %s221 = ssub.s32 %s18, 1
        %s222 = sand.u32 %s52, 1
        %s223 = scalar_lea.sflag [#allocation4], %s222
        %s224 = sand.u32 %s52, 1
        %s225 = smul.addr %s224, 8
        %s226 = scalar_lea.vmem [#allocation3], %s225
        // Predicated region
        $region33: #{tpu_custom_call.1} parent=31 // pred_check
          %p227 = pneg %p65
        $region34: #{tpu_custom_call.1} parent=31 // pred_check_branch
          %229 = sbr.rel (%p227) target = $region36
        $region35: #{tpu_custom_call.1} parent=31 // pred_region
          %230 = dma.done %s223, 128
        $region36: #{tpu_custom_call.1} parent=31 // pred_fallthru
          _
        %s231 = sand.u32 %s80, 1
        %s232 = scalar_lea.sflag [#allocation7], %s231
        %s233 = sand.u32 %s80, 1
        %s234 = smul.addr %s233, 128
        %s235 = scalar_lea.vmem [#allocation6], %s234
        // Predicated region
        $region37: #{tpu_custom_call.1} parent=31 // pred_check
          %p236 = pneg %p93
        $region38: #{tpu_custom_call.1} parent=31 // pred_check_branch
          %238 = sbr.rel (%p236) target = $region40
        $region39: #{tpu_custom_call.1} parent=31 // pred_region
          %239 = dma.done %s232, 2048
        $region40: #{tpu_custom_call.1} parent=31 // pred_fallthru
          _
        %s240 = sand.u32 %s52, 1
        %s241 = scalar_lea.sflag [#allocation4], %s240
        %s242 = sand.u32 %s52, 1
        %s243 = smul.addr %s242, 8
        %s244 = scalar_lea.vmem [#allocation3], %s243
        %p245 = pneg %p65
        %p246 = pneg %p62
        %s247 = sand.u32 %s80, 1
        %s248 = scalar_lea.sflag [#allocation7], %s247
        %s249 = sand.u32 %s80, 1
        %s250 = smul.addr %s249, 128
        %s251 = scalar_lea.vmem [#allocation6], %s250
        %p252 = pneg %p93
        %p253 = pneg %p90
        %p254 = scmp.lt.s32.totalorder %s29, 1
        %s255 = scalar_select %p254, %s29, 1
        %s256 = scalar_lea.vmem %s2, %s255
        %p257 = pneg %p119
        %p258 = pneg %p116
        %p259 = pneg %p147
        %p260 = pneg %p144
        %s261 = sand.u32 %s134, 1
        %s262 = scalar_lea.sflag [#allocation5], %s261
        %s263 = sand.u32 %s134, 1
        %s264 = smul.addr %s263, 8
        %s265 = scalar_lea.vmem [#allocation8], %s264
        %s266 = smul.u32 16, %s30
        %p267 = scmp.lt.s32.totalorder %s29, 1
        %s268 = scalar_select %p267, %s29, 1
        %s269 = scalar_lea.vmem %s2, %s268
        %p270 = scmp.eq.s32.totalorder %s30, 0
        // Predicated region
        $region41: #{tpu_custom_call.1} parent=31 // pred_check
          %p271 = pneg %p270
        $region42: #{tpu_custom_call.1} parent=31 // pred_check_branch
          %273 = sbr.rel (%p271) target = $region44
        $region43: #{tpu_custom_call.1} parent=31 // pred_region
          %274 = vst [vmem:[%s265] sm:$0xff] 0.0
          %vm275 = vcmask 7168
          %276 = vst.msk [vmem:[#allocation2] sm:$0xff] %vm275, 0.0
        $region44: #{tpu_custom_call.1} parent=31 // pred_fallthru
          _
        %v277 = vld [vmem:[%s226] sm:$0xff]
        %v278 = vld [vmem:[#allocation2] sm:$0xff]
        %v279 = vmul.f32 %v277, %v277
        %280 = vadd.xlane.f32.xlu0 %v279
        %v281 = vpop.xlane.xlu0 %280
        %v282 = vadd.f32 %v278, %v281
        %vm283 = vcmask 7168
        %284 = vst.msk [vmem:[#allocation2] sm:$0xff] %vm283, %v282
        %v285 = vld [vmem:[%s265] sm:$0xff]
        %v286 = vld [vmem:[%s235] sm:$0xff]
        %v287 = vld [vmem:[%s235 + $0x8] sm:$0xff]
        %v288 = vld [vmem:[%s235 + $0x10] sm:$0xff]
        %v289 = vld [vmem:[%s235 + $0x18] sm:$0xff]
        %v290 = vld [vmem:[%s235 + $0x20] sm:$0xff]
        %v291 = vld [vmem:[%s235 + $0x28] sm:$0xff]
        %v292 = vld [vmem:[%s235 + $0x30] sm:$0xff]
        %v293 = vld [vmem:[%s235 + $0x38] sm:$0xff]
        %v294 = vld [vmem:[%s235 + $0x40] sm:$0xff]
        %v295 = vld [vmem:[%s235 + $0x48] sm:$0xff]
        %v296 = vld [vmem:[%s235 + $0x50] sm:$0xff]
        %v297 = vld [vmem:[%s235 + $0x58] sm:$0xff]
        %v298 = vld [vmem:[%s235 + $0x60] sm:$0xff]
        %v299 = vld [vmem:[%s235 + $0x68] sm:$0xff]
        %v300 = vld [vmem:[%s235 + $0x70] sm:$0xff]
        %v301 = vld [vmem:[%s235 + $0x78] sm:$0xff]
        %302 = vmatprep.subr.mxu0 0.0
        %303 = vmatpush1.msra.mxu0 %v286
        %304 = vmatprep.subr.mxu0 0.0
        %305 = vmatpush1.msra.mxu0 %v287
        %306 = vmatprep.subr.mxu0 0.0
        %307 = vmatpush1.msra.mxu0 %v288
        %308 = vmatprep.subr.mxu0 0.0
        %309 = vmatpush1.msra.mxu0 %v289
        %310 = vmatprep.subr.mxu0 0.0
        %311 = vmatpush1.msra.mxu0 %v290
        %312 = vmatprep.subr.mxu0 0.0
        %313 = vmatpush1.msra.mxu0 %v291
        %314 = vmatprep.subr.mxu0 0.0
        %315 = vmatpush1.msra.mxu0 %v292
        %316 = vmatprep.subr.mxu0 0.0
        %317 = vmatpush1.msra.mxu0 %v293
        %318 = vmatprep.subr.mxu0 0.0
        %319 = vmatpush1.msra.mxu0 %v294
        %320 = vmatprep.subr.mxu0 0.0
        %321 = vmatpush1.msra.mxu0 %v295
        %322 = vmatprep.subr.mxu0 0.0
        %323 = vmatpush1.msra.mxu0 %v296
        %324 = vmatprep.subr.mxu0 0.0
        %325 = vmatpush1.msra.mxu0 %v297
        %326 = vmatprep.subr.mxu0 0.0
        %327 = vmatpush1.msra.mxu0 %v298
        %328 = vmatprep.subr.mxu0 0.0
        %329 = vmatpush1.msra.mxu0 %v299
        %330 = vmatprep.subr.mxu0 0.0
        %331 = vmatpush1.msra.mxu0 %v300
        %332 = vmatprep.subr.mxu0 0.0
        %333 = vmatpush1.msra.mxu0 %v301
        %334 = vmatprep.subr.mxu0 0.0
        %335 = vmatpush1.msra.mxu0 0.0
        %336 = vmatprep.subr.mxu0 0.0
        %337 = vmatpush1.msra.mxu0 0.0
        %338 = vmatprep.subr.mxu0 0.0
        %339 = vmatpush1.msra.mxu0 0.0
        %340 = vmatprep.subr.mxu0 0.0
        %341 = vmatpush1.msra.mxu0 0.0
        %342 = vmatprep.subr.mxu0 0.0
        %343 = vmatpush1.msra.mxu0 0.0
        %344 = vmatprep.subr.mxu0 0.0
        %345 = vmatpush1.msra.mxu0 0.0
        %346 = vmatprep.subr.mxu0 0.0
        %347 = vmatpush1.msra.mxu0 0.0
        %348 = vmatprep.subr.mxu0 0.0
        %349 = vmatpush1.msra.mxu0 0.0
        %350 = vmatprep.subr.mxu0 0.0
        %351 = vmatpush1.msra.mxu0 0.0
        %352 = vmatprep.subr.mxu0 0.0
        %353 = vmatpush1.msra.mxu0 0.0
        %354 = vmatprep.subr.mxu0 0.0
        %355 = vmatpush1.msra.mxu0 0.0
        %356 = vmatprep.subr.mxu0 0.0
        %357 = vmatpush1.msra.mxu0 0.0
        %358 = vmatprep.subr.mxu0 0.0
        %359 = vmatpush1.msra.mxu0 0.0
        %360 = vmatprep.subr.mxu0 0.0
        %361 = vmatpush1.msra.mxu0 0.0
        %362 = vmatprep.subr.mxu0 0.0
        %363 = vmatpush1.msra.mxu0 0.0
        %364 = vmatprep.subr.mxu0 0.0
        %365 = vmatpush1.msra.mxu0 0.0
        %366 = vmatprep.mubr.f32.mxu0 0.0
        %367 = vmatmul.mubr.f32.gmra.mrb[0].mxu0 %v277
        %v368 = vpop.f32.mrb[0].mxu0
        %v369 = vadd.f32 0.0, %v368
        %v370 = vpop.f32.mrb[0].mxu0
        %371 = vdwg.mxu0
        %v372 = vadd.f32 %v285, %v369
        %373 = vst [vmem:[%s265] sm:$0xff] %v372
        %p374 = scmp.eq.s32.totalorder %s30, 1
        // Predicated region
        $region45: #{tpu_custom_call.1} parent=31 // pred_check
          %p375 = pneg %p374
        $region46: #{tpu_custom_call.1} parent=31 // pred_check_branch
          %377 = sbr.rel (%p375) target = $region48
        $region47: #{tpu_custom_call.1} parent=31 // pred_region
          %v378 = vld [vmem:[#allocation2] sm:$0xff]
          %v379 = vmax.f32 %v378, 1e-24
          %v380 = vrsqrt.pop %v379
          %v381 = vld [vmem:[%s265] sm:$0xff]
          %383 = vset.pattern.permute.xlu0 0
          %384 = vperm.xlu0 %383, %v380
          %v385 = vpop.permute.xlu0 %384
          %v387 = vmul.f32 %v381, %v385
          %v388 = vld [vmem:[%s269] sm:$0x1]
          %v390 = vlaneseq
          %v391 = vshrl.u32 %v390, 7
          %v392 = vsub.s32 0, %v391
          %v393 = vrot.slane %v388, %v392
          %v395 = vmul.f32 %v387, %v393
          %v396 = vmax.f32 %v395, -1.0
          %v397 = vmin.f32 %v396, 1.0
          %398 = vst [vmem:[%s265] sm:$0xff] %v397
        $region48: #{tpu_custom_call.1} parent=31 // pred_fallthru
          _
        %s399 = sand.u32 %s134, 1
        %s400 = scalar_lea.sflag [#allocation5], %s399
        %s401 = sand.u32 %s134, 1
        %s402 = smul.addr %s401, 8
        %s403 = scalar_lea.vmem [#allocation8], %s402
        // Predicated region
        $region49: #{tpu_custom_call.1} parent=31 // pred_check
          %p404 = pneg %p144
        $region50: #{tpu_custom_call.1} parent=31 // pred_check_branch
          %406 = sbr.rel (%p404) target = $region52
        $region51: #{tpu_custom_call.1} parent=31 // pred_region
          %s408 = ssub.s32 128, 128
          %409 = vsyncadd %s400, %s408
          %s410 = smul.addr %s28, 2
          %s411 = sadd.s32 %s29, %s410
          %s412 = smul.addr %s411, 128
          %s413 = scalar_lea.hbm %s3, %s412
          %s415 = sshll.u32 %s403, 4
          %s416 = int_to_ptr.vmem [resolvable:$true] %s415
          %418 = dma.vmem_to_hbm [thread:$0]  %s416, 128, %s413, %s400
        $region52: #{tpu_custom_call.1} parent=31 // pred_fallthru
          _
      $region32: #{tpu_custom_call.1} parent=5 // pred_fallthru
        _
      %p419 = scmp.le.s32.totalorder 2, %s18
      // Predicated region
      $region53: #{tpu_custom_call.1} parent=5 // pred_check
        %p420 = pneg %p419
      $region54: #{tpu_custom_call.1} parent=5 // pred_check_branch
        %422 = sbr.rel (%p420) target = $region56
      $region55: #{tpu_custom_call.1} parent=5 // pred_region
        %s423 = ssub.s32 %s18, 2
        // Predicated region
        $region57: #{tpu_custom_call.1} parent=55 // pred_check
          %p424 = pneg %p150
        $region58: #{tpu_custom_call.1} parent=55 // pred_check_branch
          %426 = sbr.rel (%p424) target = $region60
        $region59: #{tpu_custom_call.1} parent=55 // pred_region
          %s427 = sand.u32 %s135, 1
          %s428 = scalar_lea.sflag [#allocation5], %s427
          %s429 = sand.u32 %s135, 1
          %s430 = smul.addr %s429, 8
          %s431 = scalar_lea.vmem [#allocation8], %s430
          %432 = dma.done %s428, 128
        $region60: #{tpu_custom_call.1} parent=55 // pred_fallthru
          _
      $region56: #{tpu_custom_call.1} parent=5 // pred_fallthru
        _
    $region6: #{tpu_custom_call.1} parent=1 // loop_footer
      %s22 = sadd.s32 1, %s18
    $region7: #{tpu_custom_call.1} parent=1 // loop_footer_branch
      %17 = sbr.rel target = $region3
    $region8: #{tpu_custom_call.1} parent=1 // loop_exit
      _
    %433 = vsyncpa [#allocation4], 1
    %s434 = scalar_lea.sflag [#allocation4], 1
    %435 = vsyncpa %s434, 1
    %436 = vsyncpa [#allocation7], 1
    %s437 = scalar_lea.sflag [#allocation7], 1
    %438 = vsyncpa %s437, 1
    %439 = vsyncpa [#allocation5], 1
    %s440 = scalar_lea.sflag [#allocation5], 1
    %441 = vsyncpa %s440, 1

</llo_original>
